<compile_context>
chip_gen: v7x
topology: tpu7x:2x2x1
jax: 0.10.0
libtpu: 0.0.40
codegen_flags: <defaults>
</compile_context>

<pallas_src>
import jax
import jax.numpy as jnp
from jax.experimental import pallas as pl
from jax.experimental.pallas import tpu as pltpu


# ----------------------------------------------------------------------------
# Kernel
# ----------------------------------------------------------------------------
def _twin_q_kernel(x_ref, w1_ref, b1_ref, w2_ref, b2_ref, w3_ref, b3_ref, q_ref):
    H = w2_ref.shape[-1]                                   # hidden width (256)
    x = x_ref[...]                                         # (tm, D_in) f32

    # Fused layer-1 for BOTH twins: one (tm, D_in) @ (D_in, 2H) MXU matmul.
    h1 = jnp.dot(x.astype(jnp.bfloat16), w1_ref[...],
                 preferred_element_type=jnp.float32)
    h1 = jnp.maximum(h1 + b1_ref[...], 0.0)                # bias + ReLU in f32

    def head(idx):
        # Layer 2 of twin `idx` (bf16 MXU, f32 accumulate).
        h = h1[:, idx * H:(idx + 1) * H]
        h = jnp.dot(h.astype(jnp.bfloat16), w2_ref[idx],
                    preferred_element_type=jnp.float32)
        h = jnp.maximum(h + b2_ref[:, idx * H:(idx + 1) * H], 0.0)
        # Final (H -> 1) projection as VPU multiply + cross-lane reduction
        # (avoids an N=1 MXU matmul that would waste the result columns).
        q = jnp.sum(h * w3_ref[idx:idx + 1, :], axis=-1, keepdims=True)
        return q + b3_ref[:, idx:idx + 1]

    q_ref[:, 0:1] = head(0).astype(q_ref.dtype)
    q_ref[:, 1:2] = head(1).astype(q_ref.dtype)


# ----------------------------------------------------------------------------
# Wrapper
# ----------------------------------------------------------------------------
def _round_up(n, m):
    return ((n + m - 1) // m) * m


def pack_twinned_q_params(params):
    """Pack per-layer params of net1/net2 into 6 DMA-friendly arrays."""
    (w1a, b1a), (w2a, b2a), (w3a, b3a) = params["net1"]
    (w1b, b1b), (w2b, b2b), (w3b, b3b) = params["net2"]
    return dict(
        w1=jnp.concatenate([w1a, w1b], axis=1).astype(jnp.bfloat16),   # (D_in, 2H)
        b1=jnp.concatenate([b1a, b1b], axis=1).astype(jnp.float32),    # (1, 2H)
        w2=jnp.stack([w2a, w2b], axis=0).astype(jnp.bfloat16),         # (2, H, H)
        b2=jnp.concatenate([b2a, b2b], axis=1).astype(jnp.float32),    # (1, 2H)
        w3=jnp.stack([w3a[:, 0], w3b[:, 0]], axis=0).astype(jnp.float32),  # (2, H)
        b3=jnp.concatenate([b3a, b3b], axis=1).astype(jnp.float32),    # (1, 2)
    )


def twinned_q_forward(z, action, packed, *, block_m=256):
    """Returns (q1, q2), each (B, 1) float32. `packed` from pack_twinned_q_params."""
    x = jnp.concatenate([z, action], axis=1).astype(jnp.float32)   # torch.cat([z, a], 1)
    B, D_in = x.shape

    w1, b1, w2, b2, w3, b3 = (packed[k] for k in ("w1", "b1", "w2", "b2", "w3", "b3"))

    # Batch tiling: weights stay resident across the grid; pad B to a tile multiple.
    tm = min(block_m, _round_up(B, 8))
    B_pad = _round_up(B, tm)
    if B_pad != B:
        x = jnp.pad(x, ((0, B_pad - B), (0, 0)))
    grid = (B_pad // tm,)

    def resident(a):
        nd = a.ndim
        return pl.BlockSpec(a.shape, lambda i, nd=nd: (0,) * nd)

    in_specs = [pl.BlockSpec((tm, D_in), lambda i: (i, 0))] + [
        resident(a) for a in (w1, b1, w2, b2, w3, b3)
    ]
    out_specs = pl.BlockSpec((tm, 2), lambda i: (i, 0))
    out_shape = jax.ShapeDtypeStruct((B_pad, 2), jnp.float32)

    q = pl.pallas_call(
        _twin_q_kernel,
        out_shape=out_shape,
        grid=grid,
        in_specs=in_specs,
        out_specs=out_specs,
        compiler_params=pltpu.CompilerParams(
            dimension_semantics=("parallel",)),
    )(x, w1, b1, w2, b2, w3, b3)

    q = q[:B]
    return q[:, 0:1], q[:, 1:2]


# ----------------------------------------------------------------------------
# Params / reference
# ----------------------------------------------------------------------------
def _init_linear(key, fan_in, fan_out):
    kw, _ = jax.random.split(key)
    w = jax.random.normal(kw, (fan_in, fan_out), jnp.float32) / jnp.sqrt(fan_in)
    b = jnp.zeros((1, fan_out), jnp.float32)
    return w, b


def init_twinned_q_params(key, input_dim, hidden_units=(256, 256)):
    dims = (input_dim,) + tuple(hidden_units) + (1,)
    params = {}
    for name in ("net1", "net2"):
        layers = []
        for fan_in, fan_out in zip(dims[:-1], dims[1:]):
            key, sub = jax.random.split(key)
            layers.append(_init_linear(sub, fan_in, fan_out))
        params[name] = layers
    return params


def _reference_forward(z, action, params):
    x = jnp.concatenate([z, action], axis=1).astype(jnp.float32)

    def mlp(layers, x):
        (w1, b1), (w2, b2), (w3, b3) = layers
        h = jnp.maximum(x @ w1 + b1, 0.0)
        h = jnp.maximum(h @ w2 + b2, 0.0)
        return h @ w3 + b3

    return mlp(params["net1"], x), mlp(params["net2"], x)


# ----------------------------------------------------------------------------
# Demo
# ----------------------------------------------------------------------------
if __name__ == "__main__":
    # action_shape = (4,), z1_dim = 16, z2_dim = 16 -> input_dim = 36; B = 8.
    B = 8
    action_dim, z1_dim, z2_dim = 4, 16, 16
    input_dim = action_dim + z1_dim + z2_dim

    key = jax.random.PRNGKey(0)
    k_params, k_z, k_a = jax.random.split(key, 3)

    params = init_twinned_q_params(k_params, input_dim, hidden_units=(256, 256))
    packed = pack_twinned_q_params(params)

    z = jax.random.normal(k_z, (B, z1_dim + z2_dim), jnp.float32)
    action = jax.random.normal(k_a, (B, action_dim), jnp.float32)

    q1, q2 = twinned_q_forward(z, action, packed)
    jax.block_until_ready((q1, q2))

    assert q1.shape == (B, 1) and q2.shape == (B, 1)

    # Correctness vs. pure-f32 reference (generous tolerance for bf16 matmuls).
    r1, r2 = _reference_forward(z, action, params)
    assert bool(jnp.all(jnp.isfinite(q1)) & jnp.all(jnp.isfinite(q2)))
    assert bool(jnp.allclose(q1, r1, atol=1e-1, rtol=1e-1))
    assert bool(jnp.allclose(q2, r2, atol=1e-1, rtol=1e-1))

    print("KERNEL_OK")
</pallas_src>

<mosaic_0001>
module attributes {stable_mosaic.version = 11 : i64} {
  func.func @_twin_q_kernel(%arg0: i32, %arg1: memref<8x36xf32, #tpu.memory_space<vmem>>, %arg2: memref<36x512xbf16, #tpu.memory_space<vmem>>, %arg3: memref<1x512xf32, #tpu.memory_space<vmem>>, %arg4: memref<2x256x256xbf16, #tpu.memory_space<vmem>>, %arg5: memref<1x512xf32, #tpu.memory_space<vmem>>, %arg6: memref<2x256xf32, #tpu.memory_space<vmem>>, %arg7: memref<1x2xf32, #tpu.memory_space<vmem>>, %arg8: memref<8x2xf32, #tpu.memory_space<vmem>>) attributes {dimension_semantics = [#tpu.dimension_semantics<parallel>], iteration_bounds = array<i64: 1>, scalar_prefetch = 0 : i64, scratch_operands = 0 : i64, tpu.core_type = #tpu.core_type<tc>, window_params = [{transform_indices = @transform_0, window_bounds = array<i64: 8, 36>}, {pipeline_mode = #tpu.pipeline_mode<synchronous>, transform_indices = @transform_1, window_bounds = array<i64: 36, 512>}, {pipeline_mode = #tpu.pipeline_mode<synchronous>, transform_indices = @transform_2, window_bounds = array<i64: 1, 512>}, {pipeline_mode = #tpu.pipeline_mode<synchronous>, transform_indices = @transform_3, window_bounds = array<i64: 2, 256, 256>}, {pipeline_mode = #tpu.pipeline_mode<synchronous>, transform_indices = @transform_4, window_bounds = array<i64: 1, 512>}, {pipeline_mode = #tpu.pipeline_mode<synchronous>, transform_indices = @transform_5, window_bounds = array<i64: 2, 256>}, {pipeline_mode = #tpu.pipeline_mode<synchronous>, transform_indices = @transform_6, window_bounds = array<i64: 1, 2>}, {transform_indices = @transform_7, window_bounds = array<i64: 8, 2>}]} {
    %c0 = arith.constant 0 : index
    %c0_0 = arith.constant 0 : index
    %0 = vector.load %arg1[%c0, %c0_0] : memref<8x36xf32, #tpu.memory_space<vmem>>, vector<8x36xf32>
    %1 = arith.truncf %0 : vector<8x36xf32> to vector<8x36xbf16>
    %c0_1 = arith.constant 0 : index
    %c0_2 = arith.constant 0 : index
    %2 = vector.load %arg2[%c0_1, %c0_2] : memref<36x512xbf16, #tpu.memory_space<vmem>>, vector<36x512xbf16>
    %cst = arith.constant dense<0.000000e+00> : vector<8x512xf32>
    %3 = tpu.matmul %1, %2, %cst {dimension_numbers = #tpu.dot_dimension_numbers<[1], [0], [0], [1], [0, 0, 1, 1], [], []>} : vector<8x36xbf16>, vector<36x512xbf16>, vector<8x512xf32> -> vector<8x512xf32>
    %c0_3 = arith.constant 0 : index
    %c0_4 = arith.constant 0 : index
    %4 = vector.load %arg3[%c0_3, %c0_4] : memref<1x512xf32, #tpu.memory_space<vmem>>, vector<1x512xf32>
    %5 = vector.broadcast %4 : vector<1x512xf32> to vector<8x512xf32>
    %6 = arith.addf %3, %5 : vector<8x512xf32>
    %cst_5 = arith.constant 0.000000e+00 : f32
    %7 = vector.broadcast %cst_5 : f32 to vector<8x512xf32>
    %8 = arith.maximumf %6, %7 : vector<8x512xf32>
    %9 = vector.extract_strided_slice %8 {offsets = [0, 0], sizes = [8, 256], strides = [1, 1]} : vector<8x512xf32> to vector<8x256xf32>
    %10 = arith.truncf %9 : vector<8x256xf32> to vector<8x256xbf16>
    %c0_6 = arith.constant 0 : index
    %c0_7 = arith.constant 0 : index
    %c0_8 = arith.constant 0 : index
    %11 = vector.load %arg4[%c0_6, %c0_7, %c0_8] : memref<2x256x256xbf16, #tpu.memory_space<vmem>>, vector<1x256x256xbf16>
    %12 = vector.shape_cast %11 : vector<1x256x256xbf16> to vector<256x256xbf16>
    %cst_9 = arith.constant dense<0.000000e+00> : vector<8x256xf32>
    %13 = tpu.matmul %10, %12, %cst_9 {dimension_numbers = #tpu.dot_dimension_numbers<[1], [0], [0], [1], [0, 0, 1, 1], [], []>} : vector<8x256xbf16>, vector<256x256xbf16>, vector<8x256xf32> -> vector<8x256xf32>
    %c0_10 = arith.constant 0 : index
    %c0_11 = arith.constant 0 : index
    %14 = vector.load %arg5[%c0_10, %c0_11] : memref<1x512xf32, #tpu.memory_space<vmem>>, vector<1x256xf32>
    %15 = vector.broadcast %14 : vector<1x256xf32> to vector<8x256xf32>
    %16 = arith.addf %13, %15 : vector<8x256xf32>
    %cst_12 = arith.constant 0.000000e+00 : f32
    %17 = vector.broadcast %cst_12 : f32 to vector<8x256xf32>
    %18 = arith.maximumf %16, %17 : vector<8x256xf32>
    %c0_13 = arith.constant 0 : index
    %c0_14 = arith.constant 0 : index
    %19 = vector.load %arg6[%c0_13, %c0_14] : memref<2x256xf32, #tpu.memory_space<vmem>>, vector<1x256xf32>
    %20 = vector.broadcast %19 : vector<1x256xf32> to vector<8x256xf32>
    %21 = arith.mulf %18, %20 : vector<8x256xf32>
    %cst_15 = arith.constant dense<0.000000e+00> : vector<8xf32>
    %22 = vector.multi_reduction <add>, %21, %cst_15 [1] : vector<8x256xf32> to vector<8xf32>
    %23 = vector.shape_cast %22 : vector<8xf32> to vector<8x1xf32>
    %c0_16 = arith.constant 0 : index
    %c0_17 = arith.constant 0 : index
    %24 = vector.load %arg7[%c0_16, %c0_17] : memref<1x2xf32, #tpu.memory_space<vmem>>, vector<1x1xf32>
    %25 = vector.broadcast %24 : vector<1x1xf32> to vector<8x1xf32>
    %26 = arith.addf %23, %25 : vector<8x1xf32>
    %c0_18 = arith.constant 0 : index
    %c0_19 = arith.constant 0 : index
    %27 = vector.load %arg8[%c0_18, %c0_19] : memref<8x2xf32, #tpu.memory_space<vmem>>, vector<8x1xf32>
    tpu.vector_store %arg8[%c0_18, %c0_19], %26 {strides = array<i32>} : memref<8x2xf32, #tpu.memory_space<vmem>>, vector<8x1xf32>,
    %28 = vector.extract_strided_slice %8 {offsets = [0, 256], sizes = [8, 256], strides = [1, 1]} : vector<8x512xf32> to vector<8x256xf32>
    %29 = arith.truncf %28 : vector<8x256xf32> to vector<8x256xbf16>
    %c1 = arith.constant 1 : index
    %c0_20 = arith.constant 0 : index
    %c0_21 = arith.constant 0 : index
    %30 = vector.load %arg4[%c1, %c0_20, %c0_21] : memref<2x256x256xbf16, #tpu.memory_space<vmem>>, vector<1x256x256xbf16>
    %31 = vector.shape_cast %30 : vector<1x256x256xbf16> to vector<256x256xbf16>
    %cst_22 = arith.constant dense<0.000000e+00> : vector<8x256xf32>
    %32 = tpu.matmul %29, %31, %cst_22 {dimension_numbers = #tpu.dot_dimension_numbers<[1], [0], [0], [1], [0, 0, 1, 1], [], []>} : vector<8x256xbf16>, vector<256x256xbf16>, vector<8x256xf32> -> vector<8x256xf32>
    %c0_23 = arith.constant 0 : index
    %c256 = arith.constant 256 : index
    %33 = vector.load %arg5[%c0_23, %c256] : memref<1x512xf32, #tpu.memory_space<vmem>>, vector<1x256xf32>
    %34 = vector.broadcast %33 : vector<1x256xf32> to vector<8x256xf32>
    %35 = arith.addf %32, %34 : vector<8x256xf32>
    %cst_24 = arith.constant 0.000000e+00 : f32
    %36 = vector.broadcast %cst_24 : f32 to vector<8x256xf32>
    %37 = arith.maximumf %35, %36 : vector<8x256xf32>
    %c1_25 = arith.constant 1 : index
    %c0_26 = arith.constant 0 : index
    %38 = vector.load %arg6[%c1_25, %c0_26] : memref<2x256xf32, #tpu.memory_space<vmem>>, vector<1x256xf32>
    %39 = vector.broadcast %38 : vector<1x256xf32> to vector<8x256xf32>
    %40 = arith.mulf %37, %39 : vector<8x256xf32>
    %cst_27 = arith.constant dense<0.000000e+00> : vector<8xf32>
    %41 = vector.multi_reduction <add>, %40, %cst_27 [1] : vector<8x256xf32> to vector<8xf32>
    %42 = vector.shape_cast %41 : vector<8xf32> to vector<8x1xf32>
    %c0_28 = arith.constant 0 : index
    %c1_29 = arith.constant 1 : index
    %43 = vector.load %arg7[%c0_28, %c1_29] : memref<1x2xf32, #tpu.memory_space<vmem>>, vector<1x1xf32>
    %44 = vector.broadcast %43 : vector<1x1xf32> to vector<8x1xf32>
    %45 = arith.addf %42, %44 : vector<8x1xf32>
    %c0_30 = arith.constant 0 : index
    %c1_31 = arith.constant 1 : index
    %46 = vector.load %arg8[%c0_30, %c1_31] : memref<8x2xf32, #tpu.memory_space<vmem>>, vector<8x1xf32>
    tpu.vector_store %arg8[%c0_30, %c1_31], %45 {strides = array<i32>} : memref<8x2xf32, #tpu.memory_space<vmem>>, vector<8x1xf32>,
    return
  }
  func.func @transform_0(%arg0: i32) -> (i32, i32) {
    %c0_i32 = arith.constant 0 : i32
    %c0_i32_0 = arith.constant 0 : i32
    return %arg0, %c0_i32 : i32, i32
  }
  func.func @transform_1(%arg0: i32) -> (i32, i32) {
    %c0_i32 = arith.constant 0 : i32
    %c0_i32_0 = arith.constant 0 : i32
    %c0_i32_1 = arith.constant 0 : i32
    return %c0_i32, %c0_i32_0 : i32, i32
  }
  func.func @transform_2(%arg0: i32) -> (i32, i32) {
    %c0_i32 = arith.constant 0 : i32
    %c0_i32_0 = arith.constant 0 : i32
    %c0_i32_1 = arith.constant 0 : i32
    return %c0_i32, %c0_i32_0 : i32, i32
  }
  func.func @transform_3(%arg0: i32) -> (i32, i32, i32) {
    %c0_i32 = arith.constant 0 : i32
    %c0_i32_0 = arith.constant 0 : i32
    %c0_i32_1 = arith.constant 0 : i32
    %c0_i32_2 = arith.constant 0 : i32
    return %c0_i32, %c0_i32_0, %c0_i32_1 : i32, i32, i32
  }
  func.func @transform_4(%arg0: i32) -> (i32, i32) {
    %c0_i32 = arith.constant 0 : i32
    %c0_i32_0 = arith.constant 0 : i32
    %c0_i32_1 = arith.constant 0 : i32
    return %c0_i32, %c0_i32_0 : i32, i32
  }
  func.func @transform_5(%arg0: i32) -> (i32, i32) {
    %c0_i32 = arith.constant 0 : i32
    %c0_i32_0 = arith.constant 0 : i32
    %c0_i32_1 = arith.constant 0 : i32
    return %c0_i32, %c0_i32_0 : i32, i32
  }
  func.func @transform_6(%arg0: i32) -> (i32, i32) {
    %c0_i32 = arith.constant 0 : i32
    %c0_i32_0 = arith.constant 0 : i32
    %c0_i32_1 = arith.constant 0 : i32
    return %c0_i32, %c0_i32_0 : i32, i32
  }
  func.func @transform_7(%arg0: i32) -> (i32, i32) {
    %c0_i32 = arith.constant 0 : i32
    %c0_i32_0 = arith.constant 0 : i32
    return %arg0, %c0_i32 : i32, i32
  }
}

</mosaic_0001>

<llo_original>
// kernel: tpu_custom_call.1
$region0: #{tpu_custom_call.1}
  #allocation0 [shape = 'u32[]', space=smem, size = 0x4, offset = 0x4, fixed_abs, tag = 'smem constant byte address 0x4 - core index']
  #allocation1 [shape = 'u32[144,128]{1,0:T(1,128)}', space=vmem, size = 0x12000, scoped, tag = 'internal scratch']
  %s0 = inlined_call_operand.hbm [shape: f32[8,36], index: 0, kind: input, shape index: {}]
  %s1 = inlined_call_operand.hbm [shape: bf16[36,512], index: 1, kind: input, shape index: {}]
  %s2 = inlined_call_operand.vmem [shape: f32[1,512], index: 2, kind: input, shape index: {}]
  %s3 = inlined_call_operand.hbm [shape: bf16[2,256,256], index: 3, kind: input, shape index: {}]
  %s4 = inlined_call_operand.vmem [shape: f32[1,512], index: 4, kind: input, shape index: {}]
  %s5 = inlined_call_operand.vmem [shape: f32[2,256], index: 5, kind: input, shape index: {}]
  %s6 = inlined_call_operand.vmem [shape: f32[1,2], index: 6, kind: input, shape index: {}]
  %s7 = inlined_call_operand.vmem [shape: f32[8,2], index: 7, kind: output, shape index: {}]
  %s8 = sld [smem:[#allocation0]]
  $region50: #{tpu_custom_call.1} parent=0
    _
  %s10 = ssub.s32 1, %s8
  %s11 = scalar_select 0, %s10, %s8
  $region1: #{tpu_custom_call.1} parent=0
    #allocation2 [shape = 'u8[4096]{0}', space=vmem, size = 0x1000, scoped, tag = 'input window, operand 0, single buffered']
    #allocation3 [shape = 's32[1]{0}', space=sflag, size = 0x4, scoped, tag = 'scoped memory for tpu_custom_call.1']
    #allocation4 [shape = 'u8[40960]{0}', space=vmem, size = 0xa000, scoped, tag = 'input window, operand 1, single buffered']
    #allocation5 [shape = 's32[1]{0}', space=sflag, size = 0x4, scoped, tag = 'scoped memory for tpu_custom_call.1']
    #allocation6 [shape = 'u8[262144]{0}', space=vmem, size = 0x40000, scoped, tag = 'input window, operand 3, single buffered']
    %12 = vsyncpa [#allocation3], 0
    %13 = vsyncpa [#allocation5], 0
    // Predicated region
    $region2: #{tpu_custom_call.1} parent=1 // pred_check
      _
    $region3: #{tpu_custom_call.1} parent=1 // pred_check_branch
      %15 = sbr.rel (0) target = $region5
    $region4: #{tpu_custom_call.1} parent=1 // pred_region
      %s17 = ssub.s32 128, 128
      %18 = vsyncadd [#allocation3], %s17
      %s20 = sshll.u32 [#allocation2], 4
      %s21 = int_to_ptr.vmem [resolvable:$true] %s20
      %23 = dma.hbm_to_vmem [thread:$0]  %s0, 128, %s21, [#allocation3]
    $region5: #{tpu_custom_call.1} parent=1 // pred_fallthru
      _
    // Predicated region
    $region6: #{tpu_custom_call.1} parent=1 // pred_check
      _
    $region7: #{tpu_custom_call.1} parent=1 // pred_check_branch
      %25 = sbr.rel (0) target = $region9
    $region8: #{tpu_custom_call.1} parent=1 // pred_region
      %s27 = ssub.s32 1280, 1280
      %28 = vsyncadd [#allocation5], %s27
      %s29 = sshll.u32 [#allocation4], 4
      %s30 = int_to_ptr.vmem [resolvable:$true] %s29
      %35 = dma.hbm_to_vmem [thread:$0]  %s1, 1280, %s30, [#allocation5], 256, 256, 16
    $region9: #{tpu_custom_call.1} parent=1 // pred_fallthru
      _
    // Predicated region
    $region10: #{tpu_custom_call.1} parent=1 // pred_check
      _
    $region11: #{tpu_custom_call.1} parent=1 // pred_check_branch
      %37 = sbr.rel (0) target = $region13
    $region12: #{tpu_custom_call.1} parent=1 // pred_region
      _
    $region13: #{tpu_custom_call.1} parent=1 // pred_fallthru
      _
    // Predicated region
    $region14: #{tpu_custom_call.1} parent=1 // pred_check
      _
    $region15: #{tpu_custom_call.1} parent=1 // pred_check_branch
      %39 = sbr.rel (0) target = $region17
    $region16: #{tpu_custom_call.1} parent=1 // pred_region
      %s41 = ssub.s32 8192, 8192
      %42 = vsyncadd [#allocation5], %s41
      %s43 = sshll.u32 [#allocation6], 4
      %s44 = int_to_ptr.vmem [resolvable:$true] %s43
      %49 = dma.hbm_to_vmem [thread:$0]  %s3, 8192, %s44, [#allocation5], 128, 128, 8
    $region17: #{tpu_custom_call.1} parent=1 // pred_fallthru
      _
    // Predicated region
    $region18: #{tpu_custom_call.1} parent=1 // pred_check
      _
    $region19: #{tpu_custom_call.1} parent=1 // pred_check_branch
      %51 = sbr.rel (0) target = $region21
    $region20: #{tpu_custom_call.1} parent=1 // pred_region
      _
    $region21: #{tpu_custom_call.1} parent=1 // pred_fallthru
      _
    // Predicated region
    $region22: #{tpu_custom_call.1} parent=1 // pred_check
      _
    $region23: #{tpu_custom_call.1} parent=1 // pred_check_branch
      %53 = sbr.rel (0) target = $region25
    $region24: #{tpu_custom_call.1} parent=1 // pred_region
      _
    $region25: #{tpu_custom_call.1} parent=1 // pred_fallthru
      _
    // Predicated region
    $region26: #{tpu_custom_call.1} parent=1 // pred_check
      _
    $region27: #{tpu_custom_call.1} parent=1 // pred_check_branch
      %55 = sbr.rel (0) target = $region29
    $region28: #{tpu_custom_call.1} parent=1 // pred_region
      _
    $region29: #{tpu_custom_call.1} parent=1 // pred_fallthru
      _
    // Predicated region
    $region30: #{tpu_custom_call.1} parent=1 // pred_check
      _
    $region31: #{tpu_custom_call.1} parent=1 // pred_check_branch
      %57 = sbr.rel (0) target = $region33
    $region32: #{tpu_custom_call.1} parent=1 // pred_region
      %58 = dma.done [#allocation3], 128
    $region33: #{tpu_custom_call.1} parent=1 // pred_fallthru
      _
    // Predicated region
    $region34: #{tpu_custom_call.1} parent=1 // pred_check
      _
    $region35: #{tpu_custom_call.1} parent=1 // pred_check_branch
      %60 = sbr.rel (0) target = $region37
    $region36: #{tpu_custom_call.1} parent=1 // pred_region
      %61 = dma.done [#allocation5], 1280
    $region37: #{tpu_custom_call.1} parent=1 // pred_fallthru
      _
    // Predicated region
    $region38: #{tpu_custom_call.1} parent=1 // pred_check
      _
    $region39: #{tpu_custom_call.1} parent=1 // pred_check_branch
      %63 = sbr.rel (0) target = $region41
    $region40: #{tpu_custom_call.1} parent=1 // pred_region
      %64 = dma.done [#allocation5], 8192
    $region41: #{tpu_custom_call.1} parent=1 // pred_fallthru
      _
    %v66 = vld [vmem:[#allocation2] sm:$0xff]
    %v67 = vpack.c.bf16 %v66, %v66
    %v68 = vld [vmem:[#allocation4] sm:$0xff]
    %v69 = vld [vmem:[#allocation4 + $0x8] sm:$0xff]
    %v70 = vld [vmem:[#allocation4 + $0x10] sm:$0xff]
    %v71 = vld [vmem:[#allocation4 + $0x18] sm:$0xff]
    %v72 = vld [vmem:[#allocation4 + $0x20] sm:$0xff]
    %v73 = vld [vmem:[#allocation4 + $0x28] sm:$0xff]
    %v74 = vld [vmem:[#allocation4 + $0x30] sm:$0xff]
    %v75 = vld [vmem:[#allocation4 + $0x38] sm:$0xff]
    %v76 = vld [vmem:[#allocation4 + $0x40] sm:$0x33]
    %v77 = vld [vmem:[#allocation4 + $0x48] sm:$0x33]
    %v78 = vld [vmem:[%s2] sm:$0xf]
    %v80 = vlaneseq
    %v81 = vshrl.u32 %v80, 7
    %v82 = vsub.s32 0, %v81
    %v83 = vrot.slane %v78, %v82
    %v84 = vlaneseq
    %v85 = vshrl.u32 %v84, 7
    %v86 = vsub.s32 1, %v85
    %v87 = vrot.slane %v78, %v86
    %v88 = vlaneseq
    %v89 = vshrl.u32 %v88, 7
    %v90 = vsub.s32 2, %v89
    %v91 = vrot.slane %v78, %v90
    %v92 = vlaneseq
    %v93 = vshrl.u32 %v92, 7
    %v94 = vsub.s32 3, %v93
    %v95 = vrot.slane %v78, %v94
    %v110 = vunpack.c.l.b16 %v68
    %v111 = vunpack.c.h.b16 %v68
    %v112 = vunpack.c.l.b16 %v69
    %v113 = vunpack.c.h.b16 %v69
    %v114 = vunpack.c.l.b16 %v70
    %v115 = vunpack.c.h.b16 %v70
    %v116 = vunpack.c.l.b16 %v71
    %v117 = vunpack.c.h.b16 %v71
    %v118 = vunpack.c.l.b16 %v72
    %v119 = vunpack.c.h.b16 %v72
    %v120 = vunpack.c.l.b16 %v73
    %v121 = vunpack.c.h.b16 %v73
    %v122 = vunpack.c.l.b16 %v74
    %v123 = vunpack.c.h.b16 %v74
    %v124 = vunpack.c.l.b16 %v75
    %v125 = vunpack.c.h.b16 %v75
    %v126 = vunpack.c.l.b16 %v76
    %v127 = vunpack.c.h.b16 %v76
    %v128 = vunpack.c.l.b16 %v77
    %v129 = vunpack.c.h.b16 %v77
    %v130 = vpack.c.b16 %v114, %v110
    %v131 = vpack.c.b16 %v115, %v111
    %v132 = vpack.c.b16 %v116, %v112
    %v133 = vpack.c.b16 %v117, %v113
    %v134 = vpack.c.b16 %v122, %v118
    %v135 = vpack.c.b16 %v123, %v119
    %v136 = vpack.c.b16 %v124, %v120
    %v137 = vpack.c.b16 %v125, %v121
    %v138 = vpack.c.b16 %v126, %v126
    %v139 = vpack.c.b16 %v127, %v127
    %v140 = vpack.c.b16 %v128, %v128
    %v141 = vpack.c.b16 %v129, %v129
    %vm150 = vcmask 293888
    %v152 = vsel %vm150, %v67, 0
    %vm154 = vcmask 1041408
    %v156 = vsel %vm154, %v138, 0
    %v159 = vsel %vm154, %v139, 0
    %v162 = vsel %vm154, %v140, 0
    %v165 = vsel %vm154, %v141, 0
    %167 = vmatprep.subr.bf16.mxu0 %v131
    %168 = vmatpush1.bf16.msra.mxu0 %v130
    %169 = vmatprep.subr.bf16.mxu0 %v135
    %170 = vmatpush1.bf16.msra.mxu0 %v134
    %171 = vmatprep.subr.bf16.mxu0 %v159
    %172 = vmatpush1.bf16.msra.mxu0 %v156
    %173 = vmatprep.subr.bf16.mxu0 0
    %174 = vmatpush1.bf16.msra.mxu0 0
    %175 = vmatprep.subr.bf16.mxu0 0
    %176 = vmatpush1.bf16.msra.mxu0 0
    %177 = vmatprep.subr.bf16.mxu0 0
    %178 = vmatpush1.bf16.msra.mxu0 0
    %179 = vmatprep.subr.bf16.mxu0 0
    %180 = vmatpush1.bf16.msra.mxu0 0
    %181 = vmatprep.subr.bf16.mxu0 0
    %182 = vmatpush1.bf16.msra.mxu0 0
    %183 = vmatprep.subr.bf16.mxu0 0
    %184 = vmatpush1.bf16.msra.mxu0 0
    %185 = vmatprep.subr.bf16.mxu0 0
    %186 = vmatpush1.bf16.msra.mxu0 0
    %187 = vmatprep.subr.bf16.mxu0 0
    %188 = vmatpush1.bf16.msra.mxu0 0
    %189 = vmatprep.subr.bf16.mxu0 0
    %190 = vmatpush1.bf16.msra.mxu0 0
    %191 = vmatprep.subr.bf16.mxu0 0
    %192 = vmatpush1.bf16.msra.mxu0 0
    %193 = vmatprep.subr.bf16.mxu0 0
    %194 = vmatpush1.bf16.msra.mxu0 0
    %195 = vmatprep.subr.bf16.mxu0 0
    %196 = vmatpush1.bf16.msra.mxu0 0
    %197 = vmatprep.subr.bf16.mxu0 0
    %198 = vmatpush1.bf16.msra.mxu0 0
    %199 = vmatprep.mubr.bf16.mxu0 0
    %200 = vmatmul.mubr.bf16.gmra.mrb[0].mxu0 %v152
    %v201 = vpop.f32.mrb[0].mxu0
    %v202 = vadd.f32 %v83, %v201
    %v203 = vpop.f32.mrb[0].mxu0
    %v204 = vadd.f32 %v87, %v203
    %v205 = vpop.f32.mrb[0].mxu0
    %v206 = vpop.f32.mrb[0].mxu0
    %207 = vdwg.mxu0
    %208 = vmatprep.subr.bf16.mxu0 %v133
    %209 = vmatpush1.bf16.msra.mxu0 %v132
    %210 = vmatprep.subr.bf16.mxu0 %v137
    %211 = vmatpush1.bf16.msra.mxu0 %v136
    %212 = vmatprep.subr.bf16.mxu0 %v165
    %213 = vmatpush1.bf16.msra.mxu0 %v162
    %214 = vmatprep.subr.bf16.mxu0 0
    %215 = vmatpush1.bf16.msra.mxu0 0
    %216 = vmatprep.subr.bf16.mxu0 0
    %217 = vmatpush1.bf16.msra.mxu0 0
    %218 = vmatprep.subr.bf16.mxu0 0
    %219 = vmatpush1.bf16.msra.mxu0 0
    %220 = vmatprep.subr.bf16.mxu0 0
    %221 = vmatpush1.bf16.msra.mxu0 0
    %222 = vmatprep.subr.bf16.mxu0 0
    %223 = vmatpush1.bf16.msra.mxu0 0
    %224 = vmatprep.subr.bf16.mxu0 0
    %225 = vmatpush1.bf16.msra.mxu0 0
    %226 = vmatprep.subr.bf16.mxu0 0
    %227 = vmatpush1.bf16.msra.mxu0 0
    %228 = vmatprep.subr.bf16.mxu0 0
    %229 = vmatpush1.bf16.msra.mxu0 0
    %230 = vmatprep.subr.bf16.mxu0 0
    %231 = vmatpush1.bf16.msra.mxu0 0
    %232 = vmatprep.subr.bf16.mxu0 0
    %233 = vmatpush1.bf16.msra.mxu0 0
    %234 = vmatprep.subr.bf16.mxu0 0
    %235 = vmatpush1.bf16.msra.mxu0 0
    %236 = vmatprep.subr.bf16.mxu0 0
    %237 = vmatpush1.bf16.msra.mxu0 0
    %238 = vmatprep.subr.bf16.mxu0 0
    %239 = vmatpush1.bf16.msra.mxu0 0
    %240 = vmatprep.mubr.bf16.mxu0 0
    %241 = vmatmul.mubr.bf16.gmra.mrb[0].mxu0 %v152
    %v242 = vpop.f32.mrb[0].mxu0
    %v243 = vadd.f32 %v91, %v242
    %v244 = vpop.f32.mrb[0].mxu0
    %v245 = vadd.f32 %v95, %v244
    %v246 = vpop.f32.mrb[0].mxu0
    %v247 = vpop.f32.mrb[0].mxu0
    %248 = vdwg.mxu0
    %v249 = vmax.f32 %v202, 0.0
    %v250 = vmax.f32 %v204, 0.0
    %v251 = vmax.f32 %v243, 0.0
    %v252 = vmax.f32 %v245, 0.0
    %v253 = vpack.c.bf16 %v249, %v249
    %v254 = vpack.c.bf16 %v250, %v250
    %v255 = vld [vmem:[#allocation6] sm:$0xff]
    %v256 = vld [vmem:[#allocation6 + $0x8] sm:$0xff]
    %v257 = vld [vmem:[#allocation6 + $0x10] sm:$0xff]
    %v258 = vld [vmem:[#allocation6 + $0x18] sm:$0xff]
    %v259 = vld [vmem:[#allocation6 + $0x20] sm:$0xff]
    %v260 = vld [vmem:[#allocation6 + $0x28] sm:$0xff]
    %v261 = vld [vmem:[#allocation6 + $0x30] sm:$0xff]
    %v262 = vld [vmem:[#allocation6 + $0x38] sm:$0xff]
    %v263 = vld [vmem:[#allocation6 + $0x40] sm:$0xff]
    %v264 = vld [vmem:[#allocation6 + $0x48] sm:$0xff]
    %v265 = vld [vmem:[#allocation6 + $0x50] sm:$0xff]
    %v266 = vld [vmem:[#allocation6 + $0x58] sm:$0xff]
    %v267 = vld [vmem:[#allocation6 + $0x60] sm:$0xff]
    %v268 = vld [vmem:[#allocation6 + $0x68] sm:$0xff]
    %v269 = vld [vmem:[#allocation6 + $0x70] sm:$0xff]
    %v270 = vld [vmem:[#allocation6 + $0x78] sm:$0xff]
    %v271 = vld [vmem:[#allocation6 + $0x80] sm:$0xff]
    %v272 = vld [vmem:[#allocation6 + $0x88] sm:$0xff]
    %v273 = vld [vmem:[#allocation6 + $0x90] sm:$0xff]
    %v274 = vld [vmem:[#allocation6 + $0x98] sm:$0xff]
    %v275 = vld [vmem:[#allocation6 + $0xa0] sm:$0xff]
    %v276 = vld [vmem:[#allocation6 + $0xa8] sm:$0xff]
    %v277 = vld [vmem:[#allocation6 + $0xb0] sm:$0xff]
    %v278 = vld [vmem:[#allocation6 + $0xb8] sm:$0xff]
    %v279 = vld [vmem:[#allocation6 + $0xc0] sm:$0xff]
    %v280 = vld [vmem:[#allocation6 + $0xc8] sm:$0xff]
    %v281 = vld [vmem:[#allocation6 + $0xd0] sm:$0xff]
    %v282 = vld [vmem:[#allocation6 + $0xd8] sm:$0xff]
    %v283 = vld [vmem:[#allocation6 + $0xe0] sm:$0xff]
    %v284 = vld [vmem:[#allocation6 + $0xe8] sm:$0xff]
    %v285 = vld [vmem:[#allocation6 + $0xf0] sm:$0xff]
    %v286 = vld [vmem:[#allocation6 + $0xf8] sm:$0xff]
    %v287 = vld [vmem:[%s4] sm:$0x3]
    %v289 = vlaneseq
    %v290 = vshrl.u32 %v289, 7
    %v291 = vsub.s32 0, %v290
    %v292 = vrot.slane %v287, %v291
    %v293 = vlaneseq
    %v294 = vshrl.u32 %v293, 7
    %v295 = vsub.s32 1, %v294
    %v296 = vrot.slane %v287, %v295
    %v331 = vunpack.c.l.b16 %v255
    %v332 = vunpack.c.h.b16 %v255
    %v333 = vunpack.c.l.b16 %v256
    %v334 = vunpack.c.h.b16 %v256
    %v335 = vunpack.c.l.b16 %v257
    %v336 = vunpack.c.h.b16 %v257
    %v337 = vunpack.c.l.b16 %v258
    %v338 = vunpack.c.h.b16 %v258
    %v339 = vunpack.c.l.b16 %v259
    %v340 = vunpack.c.h.b16 %v259
    %v341 = vunpack.c.l.b16 %v260
    %v342 = vunpack.c.h.b16 %v260
    %v343 = vunpack.c.l.b16 %v261
    %v344 = vunpack.c.h.b16 %v261
    %v345 = vunpack.c.l.b16 %v262
    %v346 = vunpack.c.h.b16 %v262
    %v347 = vunpack.c.l.b16 %v263
    %v348 = vunpack.c.h.b16 %v263
    %v349 = vunpack.c.l.b16 %v264
    %v350 = vunpack.c.h.b16 %v264
    %v351 = vunpack.c.l.b16 %v265
    %v352 = vunpack.c.h.b16 %v265
    %v353 = vunpack.c.l.b16 %v266
    %v354 = vunpack.c.h.b16 %v266
    %v355 = vunpack.c.l.b16 %v267
    %v356 = vunpack.c.h.b16 %v267
    %v357 = vunpack.c.l.b16 %v268
    %v358 = vunpack.c.h.b16 %v268
    %v359 = vunpack.c.l.b16 %v269
    %v360 = vunpack.c.h.b16 %v269
    %v361 = vunpack.c.l.b16 %v270
    %v362 = vunpack.c.h.b16 %v270
    %v363 = vunpack.c.l.b16 %v271
    %v364 = vunpack.c.h.b16 %v271
    %v365 = vunpack.c.l.b16 %v272
    %v366 = vunpack.c.h.b16 %v272
    %v367 = vunpack.c.l.b16 %v273
    %v368 = vunpack.c.h.b16 %v273
    %v369 = vunpack.c.l.b16 %v274
    %v370 = vunpack.c.h.b16 %v274
    %v371 = vunpack.c.l.b16 %v275
    %v372 = vunpack.c.h.b16 %v275
    %v373 = vunpack.c.l.b16 %v276
    %v374 = vunpack.c.h.b16 %v276
    %v375 = vunpack.c.l.b16 %v277
    %v376 = vunpack.c.h.b16 %v277
    %v377 = vunpack.c.l.b16 %v278
    %v378 = vunpack.c.h.b16 %v278
    %v379 = vunpack.c.l.b16 %v279
    %v380 = vunpack.c.h.b16 %v279
    %v381 = vunpack.c.l.b16 %v280
    %v382 = vunpack.c.h.b16 %v280
    %v383 = vunpack.c.l.b16 %v281
    %v384 = vunpack.c.h.b16 %v281
    %v385 = vunpack.c.l.b16 %v282
    %v386 = vunpack.c.h.b16 %v282
    %v387 = vunpack.c.l.b16 %v283
    %v388 = vunpack.c.h.b16 %v283
    %v389 = vunpack.c.l.b16 %v284
    %v390 = vunpack.c.h.b16 %v284
    %v391 = vunpack.c.l.b16 %v285
    %v392 = vunpack.c.h.b16 %v285
    %v393 = vunpack.c.l.b16 %v286
    %v394 = vunpack.c.h.b16 %v286
    %v395 = vpack.c.b16 %v333, %v331
    %v396 = vpack.c.b16 %v334, %v332
    %v397 = vpack.c.b16 %v337, %v335
    %v398 = vpack.c.b16 %v338, %v336
    %v399 = vpack.c.b16 %v341, %v339
    %v400 = vpack.c.b16 %v342, %v340
    %v401 = vpack.c.b16 %v345, %v343
    %v402 = vpack.c.b16 %v346, %v344
    %v403 = vpack.c.b16 %v349, %v347
    %v404 = vpack.c.b16 %v350, %v348
    %v405 = vpack.c.b16 %v353, %v351
    %v406 = vpack.c.b16 %v354, %v352
    %v407 = vpack.c.b16 %v357, %v355
    %v408 = vpack.c.b16 %v358, %v356
    %v409 = vpack.c.b16 %v361, %v359
    %v410 = vpack.c.b16 %v362, %v360
    %v411 = vpack.c.b16 %v365, %v363
    %v412 = vpack.c.b16 %v366, %v364
    %v413 = vpack.c.b16 %v369, %v367
    %v414 = vpack.c.b16 %v370, %v368
    %v415 = vpack.c.b16 %v373, %v371
    %v416 = vpack.c.b16 %v374, %v372
    %v417 = vpack.c.b16 %v377, %v375
    %v418 = vpack.c.b16 %v378, %v376
    %v419 = vpack.c.b16 %v381, %v379
    %v420 = vpack.c.b16 %v382, %v380
    %v421 = vpack.c.b16 %v385, %v383
    %v422 = vpack.c.b16 %v386, %v384
    %v423 = vpack.c.b16 %v389, %v387
    %v424 = vpack.c.b16 %v390, %v388
    %v425 = vpack.c.b16 %v393, %v391
    %v426 = vpack.c.b16 %v394, %v392
    %459 = vmatprep.subr.bf16.mxu0 %v396
    %460 = vmatpush1.bf16.msra.mxu0 %v395
    %461 = vmatprep.subr.bf16.mxu0 %v398
    %462 = vmatpush1.bf16.msra.mxu0 %v397
    %463 = vmatprep.subr.bf16.mxu0 %v400
    %464 = vmatpush1.bf16.msra.mxu0 %v399
    %465 = vmatprep.subr.bf16.mxu0 %v402
    %466 = vmatpush1.bf16.msra.mxu0 %v401
    %467 = vmatprep.subr.bf16.mxu0 %v404
    %468 = vmatpush1.bf16.msra.mxu0 %v403
    %469 = vmatprep.subr.bf16.mxu0 %v406
    %470 = vmatpush1.bf16.msra.mxu0 %v405
    %471 = vmatprep.subr.bf16.mxu0 %v408
    %472 = vmatpush1.bf16.msra.mxu0 %v407
    %473 = vmatprep.subr.bf16.mxu0 %v410
    %474 = vmatpush1.bf16.msra.mxu0 %v409
    %475 = vmatprep.subr.bf16.mxu0 %v412
    %476 = vmatpush1.bf16.msra.mxu0 %v411
    %477 = vmatprep.subr.bf16.mxu0 %v414
    %478 = vmatpush1.bf16.msra.mxu0 %v413
    %479 = vmatprep.subr.bf16.mxu0 %v416
    %480 = vmatpush1.bf16.msra.mxu0 %v415
    %481 = vmatprep.subr.bf16.mxu0 %v418
    %482 = vmatpush1.bf16.msra.mxu0 %v417
    %483 = vmatprep.subr.bf16.mxu0 %v420
    %484 = vmatpush1.bf16.msra.mxu0 %v419
    %485 = vmatprep.subr.bf16.mxu0 %v422
    %486 = vmatpush1.bf16.msra.mxu0 %v421
    %487 = vmatprep.subr.bf16.mxu0 %v424
    %488 = vmatpush1.bf16.msra.mxu0 %v423
    %489 = vmatprep.subr.bf16.mxu0 %v426
    %490 = vmatpush1.bf16.msra.mxu0 %v425
    %491 = vmatprep.mubr.bf16.mxu0 %v254
    %492 = vmatmul.mubr.bf16.gmra.mrb[0].mxu0 %v253
    %v493 = vpop.f32.mrb[0].mxu0
    %v494 = vadd.f32 %v292, %v493
    %v495 = vpop.f32.mrb[0].mxu0
    %v496 = vadd.f32 %v296, %v495
    %v497 = vpop.f32.mrb[0].mxu0
    %v498 = vpop.f32.mrb[0].mxu0
    %499 = vdwg.mxu0
    %v500 = vmax.f32 %v494, 0.0
    %v501 = vmax.f32 %v496, 0.0
    %v502 = vld [vmem:[%s5] ss:$2 sm:$0x3]
    %v504 = vlaneseq
    %v505 = vshrl.u32 %v504, 7
    %v506 = vsub.s32 0, %v505
    %v507 = vrot.slane %v502, %v506
    %v508 = vlaneseq
    %v509 = vshrl.u32 %v508, 7
    %v510 = vsub.s32 1, %v509
    %v511 = vrot.slane %v502, %v510
    %v514 = vmul.f32 %v500, %v507
    %v515 = vmul.f32 %v501, %v511
    %v516 = vadd.f32 %v514, %v515
    %517 = vadd.xlane.f32.xlu0 %v516
    %v518 = vpop.xlane.xlu0 %517
    %v519 = vld [vmem:[%s6] sm:$0x1]
    %v521 = vlaneseq
    %v522 = vshrl.u32 %v521, 7
    %v523 = vsub.s32 0, %v522
    %v524 = vrot.slane %v519, %v523
    %v526 = vadd.f32 %v518, %v524
    %vm527 = vcmask 7168
    %528 = vst.msk [vmem:[%s7] sm:$0xff] %vm527, %v526
    %v529 = vpack.c.bf16 %v251, %v251
    %v530 = vpack.c.bf16 %v252, %v252
    %s531 = scalar_lea.vmem [#allocation6], 256
    %v532 = vld [vmem:[%s531] sm:$0xff]
    %v533 = vld [vmem:[%s531 + $0x8] sm:$0xff]
    %v534 = vld [vmem:[%s531 + $0x10] sm:$0xff]
    %v535 = vld [vmem:[%s531 + $0x18] sm:$0xff]
    %v536 = vld [vmem:[%s531 + $0x20] sm:$0xff]
    %v537 = vld [vmem:[%s531 + $0x28] sm:$0xff]
    %v538 = vld [vmem:[%s531 + $0x30] sm:$0xff]
    %v539 = vld [vmem:[%s531 + $0x38] sm:$0xff]
    %v540 = vld [vmem:[%s531 + $0x40] sm:$0xff]
    %v541 = vld [vmem:[%s531 + $0x48] sm:$0xff]
    %v542 = vld [vmem:[%s531 + $0x50] sm:$0xff]
    %v543 = vld [vmem:[%s531 + $0x58] sm:$0xff]
    %v544 = vld [vmem:[%s531 + $0x60] sm:$0xff]
    %v545 = vld [vmem:[%s531 + $0x68] sm:$0xff]
    %v546 = vld [vmem:[%s531 + $0x70] sm:$0xff]
    %v547 = vld [vmem:[%s531 + $0x78] sm:$0xff]
    %v548 = vld [vmem:[%s531 + $0x80] sm:$0xff]
    %v549 = vld [vmem:[%s531 + $0x88] sm:$0xff]
    %v550 = vld [vmem:[%s531 + $0x90] sm:$0xff]
    %v551 = vld [vmem:[%s531 + $0x98] sm:$0xff]
    %v552 = vld [vmem:[%s531 + $0xa0] sm:$0xff]
    %v553 = vld [vmem:[%s531 + $0xa8] sm:$0xff]
    %v554 = vld [vmem:[%s531 + $0xb0] sm:$0xff]
    %v555 = vld [vmem:[%s531 + $0xb8] sm:$0xff]
    %v556 = vld [vmem:[%s531 + $0xc0] sm:$0xff]
    %v557 = vld [vmem:[%s531 + $0xc8] sm:$0xff]
    %v558 = vld [vmem:[%s531 + $0xd0] sm:$0xff]
    %v559 = vld [vmem:[%s531 + $0xd8] sm:$0xff]
    %v560 = vld [vmem:[%s531 + $0xe0] sm:$0xff]
    %v561 = vld [vmem:[%s531 + $0xe8] sm:$0xff]
    %v562 = vld [vmem:[%s531 + $0xf0] sm:$0xff]
    %v563 = vld [vmem:[%s531 + $0xf8] sm:$0xff]
    %v564 = vld [vmem:[%s4 + $0x2] sm:$0x3]
    %v566 = vlaneseq
    %v567 = vshrl.u32 %v566, 7
    %v568 = vsub.s32 0, %v567
    %v569 = vrot.slane %v564, %v568
    %v570 = vlaneseq
    %v571 = vshrl.u32 %v570, 7
    %v572 = vsub.s32 1, %v571
    %v573 = vrot.slane %v564, %v572
    %v608 = vunpack.c.l.b16 %v532
    %v609 = vunpack.c.h.b16 %v532
    %v610 = vunpack.c.l.b16 %v533
    %v611 = vunpack.c.h.b16 %v533
    %v612 = vunpack.c.l.b16 %v534
    %v613 = vunpack.c.h.b16 %v534
    %v614 = vunpack.c.l.b16 %v535
    %v615 = vunpack.c.h.b16 %v535
    %v616 = vunpack.c.l.b16 %v536
    %v617 = vunpack.c.h.b16 %v536
    %v618 = vunpack.c.l.b16 %v537
    %v619 = vunpack.c.h.b16 %v537
    %v620 = vunpack.c.l.b16 %v538
    %v621 = vunpack.c.h.b16 %v538
    %v622 = vunpack.c.l.b16 %v539
    %v623 = vunpack.c.h.b16 %v539
    %v624 = vunpack.c.l.b16 %v540
    %v625 = vunpack.c.h.b16 %v540
    %v626 = vunpack.c.l.b16 %v541
    %v627 = vunpack.c.h.b16 %v541
    %v628 = vunpack.c.l.b16 %v542
    %v629 = vunpack.c.h.b16 %v542
    %v630 = vunpack.c.l.b16 %v543
    %v631 = vunpack.c.h.b16 %v543
    %v632 = vunpack.c.l.b16 %v544
    %v633 = vunpack.c.h.b16 %v544
    %v634 = vunpack.c.l.b16 %v545
    %v635 = vunpack.c.h.b16 %v545
    %v636 = vunpack.c.l.b16 %v546
    %v637 = vunpack.c.h.b16 %v546
    %v638 = vunpack.c.l.b16 %v547
    %v639 = vunpack.c.h.b16 %v547
    %v640 = vunpack.c.l.b16 %v548
    %v641 = vunpack.c.h.b16 %v548
    %v642 = vunpack.c.l.b16 %v549
    %v643 = vunpack.c.h.b16 %v549
    %v644 = vunpack.c.l.b16 %v550
    %v645 = vunpack.c.h.b16 %v550
    %v646 = vunpack.c.l.b16 %v551
    %v647 = vunpack.c.h.b16 %v551
    %v648 = vunpack.c.l.b16 %v552
    %v649 = vunpack.c.h.b16 %v552
    %v650 = vunpack.c.l.b16 %v553
    %v651 = vunpack.c.h.b16 %v553
    %v652 = vunpack.c.l.b16 %v554
    %v653 = vunpack.c.h.b16 %v554
    %v654 = vunpack.c.l.b16 %v555
    %v655 = vunpack.c.h.b16 %v555
    %v656 = vunpack.c.l.b16 %v556
    %v657 = vunpack.c.h.b16 %v556
    %v658 = vunpack.c.l.b16 %v557
    %v659 = vunpack.c.h.b16 %v557
    %v660 = vunpack.c.l.b16 %v558
    %v661 = vunpack.c.h.b16 %v558
    %v662 = vunpack.c.l.b16 %v559
    %v663 = vunpack.c.h.b16 %v559
    %v664 = vunpack.c.l.b16 %v560
    %v665 = vunpack.c.h.b16 %v560
    %v666 = vunpack.c.l.b16 %v561
    %v667 = vunpack.c.h.b16 %v561
    %v668 = vunpack.c.l.b16 %v562
    %v669 = vunpack.c.h.b16 %v562
    %v670 = vunpack.c.l.b16 %v563
    %v671 = vunpack.c.h.b16 %v563
    %v672 = vpack.c.b16 %v610, %v608
    %v673 = vpack.c.b16 %v611, %v609
    %v674 = vpack.c.b16 %v614, %v612
    %v675 = vpack.c.b16 %v615, %v613
    %v676 = vpack.c.b16 %v618, %v616
    %v677 = vpack.c.b16 %v619, %v617
    %v678 = vpack.c.b16 %v622, %v620
    %v679 = vpack.c.b16 %v623, %v621
    %v680 = vpack.c.b16 %v626, %v624
    %v681 = vpack.c.b16 %v627, %v625
    %v682 = vpack.c.b16 %v630, %v628
    %v683 = vpack.c.b16 %v631, %v629
    %v684 = vpack.c.b16 %v634, %v632
    %v685 = vpack.c.b16 %v635, %v633
    %v686 = vpack.c.b16 %v638, %v636
    %v687 = vpack.c.b16 %v639, %v637
    %v688 = vpack.c.b16 %v642, %v640
    %v689 = vpack.c.b16 %v643, %v641
    %v690 = vpack.c.b16 %v646, %v644
    %v691 = vpack.c.b16 %v647, %v645
    %v692 = vpack.c.b16 %v650, %v648
    %v693 = vpack.c.b16 %v651, %v649
    %v694 = vpack.c.b16 %v654, %v652
    %v695 = vpack.c.b16 %v655, %v653
    %v696 = vpack.c.b16 %v658, %v656
    %v697 = vpack.c.b16 %v659, %v657
    %v698 = vpack.c.b16 %v662, %v660
    %v699 = vpack.c.b16 %v663, %v661
    %v700 = vpack.c.b16 %v666, %v664
    %v701 = vpack.c.b16 %v667, %v665
    %v702 = vpack.c.b16 %v670, %v668
    %v703 = vpack.c.b16 %v671, %v669
    %736 = vmatprep.subr.bf16.mxu0 %v673
    %737 = vmatpush1.bf16.msra.mxu0 %v672
    %738 = vmatprep.subr.bf16.mxu0 %v675
    %739 = vmatpush1.bf16.msra.mxu0 %v674
    %740 = vmatprep.subr.bf16.mxu0 %v677
    %741 = vmatpush1.bf16.msra.mxu0 %v676
    %742 = vmatprep.subr.bf16.mxu0 %v679
    %743 = vmatpush1.bf16.msra.mxu0 %v678
    %744 = vmatprep.subr.bf16.mxu0 %v681
    %745 = vmatpush1.bf16.msra.mxu0 %v680
    %746 = vmatprep.subr.bf16.mxu0 %v683
    %747 = vmatpush1.bf16.msra.mxu0 %v682
    %748 = vmatprep.subr.bf16.mxu0 %v685
    %749 = vmatpush1.bf16.msra.mxu0 %v684
    %750 = vmatprep.subr.bf16.mxu0 %v687
    %751 = vmatpush1.bf16.msra.mxu0 %v686
    %752 = vmatprep.subr.bf16.mxu0 %v689
    %753 = vmatpush1.bf16.msra.mxu0 %v688
    %754 = vmatprep.subr.bf16.mxu0 %v691
    %755 = vmatpush1.bf16.msra.mxu0 %v690
    %756 = vmatprep.subr.bf16.mxu0 %v693
    %757 = vmatpush1.bf16.msra.mxu0 %v692
    %758 = vmatprep.subr.bf16.mxu0 %v695
    %759 = vmatpush1.bf16.msra.mxu0 %v694
    %760 = vmatprep.subr.bf16.mxu0 %v697
    %761 = vmatpush1.bf16.msra.mxu0 %v696
    %762 = vmatprep.subr.bf16.mxu0 %v699
    %763 = vmatpush1.bf16.msra.mxu0 %v698
    %764 = vmatprep.subr.bf16.mxu0 %v701
    %765 = vmatpush1.bf16.msra.mxu0 %v700
    %766 = vmatprep.subr.bf16.mxu0 %v703
    %767 = vmatpush1.bf16.msra.mxu0 %v702
    %768 = vmatprep.mubr.bf16.mxu0 %v530
    %769 = vmatmul.mubr.bf16.gmra.mrb[0].mxu0 %v529
    %v770 = vpop.f32.mrb[0].mxu0
    %v771 = vadd.f32 %v569, %v770
    %v772 = vpop.f32.mrb[0].mxu0
    %v773 = vadd.f32 %v573, %v772
    %v774 = vpop.f32.mrb[0].mxu0
    %v775 = vpop.f32.mrb[0].mxu0
    %776 = vdwg.mxu0
    %v777 = vmax.f32 %v771, 0.0
    %v778 = vmax.f32 %v773, 0.0
    %s779 = scalar_lea.vmem %s5, 1
    %v780 = vld [vmem:[%s779] ss:$2 sm:$0x3]
    %v782 = vlaneseq
    %v783 = vshrl.u32 %v782, 7
    %v784 = vsub.s32 0, %v783
    %v785 = vrot.slane %v780, %v784
    %v786 = vlaneseq
    %v787 = vshrl.u32 %v786, 7
    %v788 = vsub.s32 1, %v787
    %v789 = vrot.slane %v780, %v788
    %v792 = vmul.f32 %v777, %v785
    %v793 = vmul.f32 %v778, %v789
    %v794 = vadd.f32 %v792, %v793
    %795 = vadd.xlane.f32.xlu0 %v794
    %v796 = vpop.xlane.xlu0 %795
    %v797 = vld [vmem:[%s6] sm:$0x1]
    %v799 = vlaneseq
    %v800 = vshrl.u32 %v799, 7
    %v801 = vsub.s32 0, %v800
    %v802 = vrot.slane %v797, %v801
    %v804 = vadd.f32 %v796, %v802
    %vm805 = vcmask 15368
    %806 = vst.msk [vmem:[%s7] sm:$0xff] %vm805, %v804
    // Predicated region
    $region42: #{tpu_custom_call.1} parent=1 // pred_check
      _
    $region43: #{tpu_custom_call.1} parent=1 // pred_check_branch
      %808 = sbr.rel (0) target = $region45
    $region44: #{tpu_custom_call.1} parent=1 // pred_region
      _
    $region45: #{tpu_custom_call.1} parent=1 // pred_fallthru
      _
    // Predicated region
    $region46: #{tpu_custom_call.1} parent=1 // pred_check
      _
    $region47: #{tpu_custom_call.1} parent=1 // pred_check_branch
      %810 = sbr.rel (0) target = $region49
    $region48: #{tpu_custom_call.1} parent=1 // pred_region
      _
    $region49: #{tpu_custom_call.1} parent=1 // pred_fallthru
      _
    %811 = vsyncpa [#allocation3], 1
    %812 = vsyncpa [#allocation5], 1

</llo_original>
